<compile_context>
chip_gen: v6e
topology: v6e:2x2x1
jax: 0.10.0
libtpu: 0.0.40
codegen_flags: <defaults>
</compile_context>

<pallas_src>
import jax
import jax.numpy as jnp
from jax.experimental import pallas as pl
from jax.experimental.pallas import tpu as pltpu

_LANES = 128
_TARGET_BLOCK_BYTES = 2 * 1024 * 1024     # ~2 MiB of native-dtype data per block
_SMALL_INPUT_ELEMS = 1 << 18              # below this, pure-jnp fast path
_VMEM_LIMIT_BYTES = 32 * 1024 * 1024      # safe on v5e/v6e/v7x scoped VMEM


def _elementwise_loss(x, gan_type, target_label):
    """Per-element GAN loss in f32 against a compile-time scalar target."""
    if gan_type == 'vanilla':
        # Numerically stable BCE-with-logits: max(x,0) - x*t + log1p(exp(-|x|))
        t = jnp.float32(target_label)
        return jnp.maximum(x, 0.0) - x * t + jnp.log1p(jnp.exp(-jnp.abs(x)))
    if gan_type == 'lsgan':
        t = jnp.float32(target_label)
        d = x - t
        return d * d
    # 'wgan-gp': loss is (+/-) mean(x); sign applied in the wrapper.
    return x


def _make_kernel(gan_type, target_label, block_rows, rows, num_blocks):
    has_row_tail = (rows % block_rows) != 0
    valid_rows_last = rows - (num_blocks - 1) * block_rows  # python constant

    def kernel(x_ref, out_ref):
        x = x_ref[...].astype(jnp.float32)   # native-dtype DMA, cast in VMEM
        elem = _elementwise_loss(x, gan_type, target_label)

        if has_row_tail:
            b = pl.program_id(0)

            @pl.when(b == num_blocks - 1)
            def _():
                # Only the final (partial) block pays for the mask; the OOB
                # rows of the auto-pipelined input block hold unspecified data
                # so they MUST be zeroed for every gan type.
                row_i = jax.lax.broadcasted_iota(
                    jnp.int32, (block_rows, _LANES), 0)
                masked = jnp.where(row_i < valid_rows_last, elem, 0.0)
                out_ref[...] = jnp.sum(masked, axis=0, keepdims=True)

            @pl.when(b != num_blocks - 1)
            def _():
                out_ref[...] = jnp.sum(elem, axis=0, keepdims=True)
        else:
            out_ref[...] = jnp.sum(elem, axis=0, keepdims=True)

    return kernel


def _jnp_loss(x, target_is_real, gan_type, real_label_val, fake_label_val):
    """Pure-jnp path (small inputs / non-128-divisible sizes)."""
    x = x.astype(jnp.float32)
    if gan_type == 'wgan-gp':
        m = jnp.mean(x)
        return -m if target_is_real else m
    t = jnp.float32(real_label_val if target_is_real else fake_label_val)
    if gan_type == 'vanilla':
        return jnp.mean(jnp.maximum(x, 0.0) - x * t
                        + jnp.log1p(jnp.exp(-jnp.abs(x))))
    return jnp.mean((x - t) ** 2)


def _reference_loss(x, target_is_real, gan_type='vanilla',
                    real_label_val=1.0, fake_label_val=0.0):
    """Independent pure-JAX reference matching the PyTorch forward."""
    x = x.astype(jnp.float32)
    if gan_type == 'wgan-gp':
        return -jnp.mean(x) if target_is_real else jnp.mean(x)
    t = jnp.float32(real_label_val if target_is_real else fake_label_val)
    if gan_type == 'vanilla':
        # Independent BCE-with-logits formulation: log(1 + e^x) - x*t
        return jnp.mean(jnp.logaddexp(0.0, x) - x * t)
    return jnp.mean((x - t) ** 2)


def _round_up(v, m):
    return ((v + m - 1) // m) * m


def gan_loss(x, target_is_real, gan_type='vanilla',
             real_label_val=1.0, fake_label_val=0.0, force_pallas=False):
    """Pallas implementation of GANLoss.forward(input, target_is_real)."""
    gan_type = gan_type.lower()
    if gan_type not in ('vanilla', 'lsgan', 'wgan-gp'):
        raise NotImplementedError(
            'GAN type [{:s}] is not found'.format(gan_type))

    n = int(x.size)
    itemsize = jnp.dtype(x.dtype).itemsize
    sub = max(8, 32 // itemsize)      # dtype-aware sublane multiple (f32:8 bf16:16 i8:32)
    rows = n // _LANES

    use_pallas = force_pallas or n >= _SMALL_INPUT_ELEMS
    if (not use_pallas) or (n % _LANES != 0) or (rows < sub):
        # TODO(synk): handle non-128-divisible element counts in-kernel instead
        # of falling back to XLA (the fallback is still a single streaming pass,
        # so no extra HBM traffic is introduced).
        return _jnp_loss(x, target_is_real, gan_type,
                         real_label_val, fake_label_val)

    target_label = None
    if gan_type != 'wgan-gp':
        target_label = float(real_label_val if target_is_real else fake_label_val)

    # Block sizing: ~2 MiB of native-dtype data per block (amortizes the
    # ~0.35 us per-grid-step cost), rounded to the dtype sublane multiple, and
    # capped so there are >= 2 blocks whenever possible (keeps both v7x
    # TensorCores busy through the "parallel" grid axis).
    rows_per_target = max(
        sub, (_TARGET_BLOCK_BYTES // (_LANES * itemsize)) // sub * sub)
    half_rows = _round_up(-(-rows // 2), sub)
    block_rows = max(sub, min(rows_per_target, half_rows))
    num_blocks = -(-rows // block_rows)

    x2d = x.reshape(rows, _LANES)   # contiguous reshape: free, no extra HBM pass

    kernel = _make_kernel(gan_type, target_label, block_rows, rows, num_blocks)

    partials = pl.pallas_call(
        kernel,
        out_shape=jax.ShapeDtypeStruct((num_blocks, 1, _LANES), jnp.float32),
        grid_spec=pltpu.PrefetchScalarGridSpec(
            num_scalar_prefetch=0,
            grid=(num_blocks,),
            in_specs=[pl.BlockSpec((block_rows, _LANES), lambda b: (b, 0))],
            # leading size-1 dim squeezed: kernel writes a lane-dense (1, 128)
            # partial sum per block (no in-kernel cross-lane reduce / masked store)
            out_specs=pl.BlockSpec((None, 1, _LANES), lambda b: (b, 0, 0)),
        ),
        compiler_params=pltpu.CompilerParams(
            dimension_semantics=("parallel",),
            vmem_limit_bytes=_VMEM_LIMIT_BYTES),
    )(x2d)

    # Tiny final combine in the wrapper (num_blocks x 128 scalars).
    mean = jnp.sum(partials) / jnp.float32(n)
    if gan_type == 'wgan-gp':
        return -mean if target_is_real else mean
    return mean


if __name__ == "__main__":
    key = jax.random.PRNGKey(0)
    # Discriminator logits, e.g. (N, C, H, W) = (2, 4, 16, 16).
    logits = jax.random.normal(key, (2, 4, 16, 16), dtype=jnp.float32)

    for gan_type in ('vanilla', 'lsgan', 'wgan-gp'):
        for target_is_real in (True, False):
            got = jax.block_until_ready(
                gan_loss(logits, target_is_real, gan_type=gan_type,
                         force_pallas=True))
            ref = jax.block_until_ready(
                _reference_loss(logits, target_is_real, gan_type=gan_type))
            assert jnp.isfinite(got), (gan_type, target_is_real, got)
            assert jnp.allclose(got, ref, rtol=1e-5, atol=1e-5), (
                gan_type, target_is_real, got, ref)

    # Auto heuristic (small-input fast path) agrees with the forced kernel path.
    fast = jax.block_until_ready(gan_loss(logits, True, gan_type='vanilla'))
    forced = jax.block_until_ready(
        gan_loss(logits, True, gan_type='vanilla', force_pallas=True))
    assert jnp.allclose(fast, forced, rtol=1e-5, atol=1e-5), (fast, forced)

    print("KERNEL_OK")
</pallas_src>

<mosaic_0001>
module attributes {stable_mosaic.version = 11 : i64} {
  func.func @kernel(%arg0: i32, %arg1: memref<8x128xf32, #tpu.memory_space<vmem>>, %arg2: memref<1x1x128xf32, #tpu.memory_space<vmem>>) attributes {dimension_semantics = [#tpu.dimension_semantics<parallel>], iteration_bounds = array<i64: 2>, scalar_prefetch = 0 : i64, scratch_operands = 0 : i64, tpu.core_type = #tpu.core_type<tc>, window_params = [{transform_indices = @transform_0, window_bounds = array<i64: 8, 128>}, {transform_indices = @transform_1, window_bounds = array<i64: 1, 1, 128>}]} {
    %c0 = arith.constant 0 : index
    %c0_0 = arith.constant 0 : index
    %0 = vector.load %arg1[%c0, %c0_0] : memref<8x128xf32, #tpu.memory_space<vmem>>, vector<8x128xf32>
    %cst = arith.constant 0.000000e+00 : f32
    %1 = vector.broadcast %cst : f32 to vector<8x128xf32>
    %2 = arith.maximumf %0, %1 : vector<8x128xf32>
    %cst_1 = arith.constant 1.000000e+00 : f32
    %3 = vector.broadcast %cst_1 : f32 to vector<8x128xf32>
    %4 = arith.mulf %0, %3 : vector<8x128xf32>
    %5 = arith.subf %2, %4 : vector<8x128xf32>
    %6 = math.absf %0 : vector<8x128xf32>
    %cst_2 = arith.constant 0.000000e+00 : f32
    %7 = vector.broadcast %cst_2 : f32 to vector<8x128xf32>
    %8 = arith.subf %7, %6 : vector<8x128xf32>
    %9 = math.exp %8 : vector<8x128xf32>
    %10 = math.log1p %9 : vector<8x128xf32>
    %11 = arith.addf %5, %10 : vector<8x128xf32>
    %cst_3 = arith.constant dense<0.000000e+00> : vector<128xf32>
    %12 = vector.multi_reduction <add>, %11, %cst_3 [0] : vector<8x128xf32> to vector<128xf32>
    %13 = vector.shape_cast %12 : vector<128xf32> to vector<1x128xf32>
    %c0_4 = arith.constant 0 : index
    %c0_5 = arith.constant 0 : index
    %c0_6 = arith.constant 0 : index
    %14 = vector.load %arg2[%c0_4, %c0_5, %c0_6] : memref<1x1x128xf32, #tpu.memory_space<vmem>>, vector<1x1x128xf32>
    %15 = vector.shape_cast %14 : vector<1x1x128xf32> to vector<1x128xf32>
    %16 = vector.shape_cast %13 : vector<1x128xf32> to vector<1x1x128xf32>
    tpu.vector_store %arg2[%c0_4, %c0_5, %c0_6], %16 {strides = array<i32>} : memref<1x1x128xf32, #tpu.memory_space<vmem>>, vector<1x1x128xf32>,
    return
  }
  func.func @transform_0(%arg0: i32) -> (i32, i32) {
    %c0_i32 = arith.constant 0 : i32
    %c0_i32_0 = arith.constant 0 : i32
    return %arg0, %c0_i32 : i32, i32
  }
  func.func @transform_1(%arg0: i32) -> (i32, i32, i32) {
    %c0_i32 = arith.constant 0 : i32
    %c0_i32_0 = arith.constant 0 : i32
    %c0_i32_1 = arith.constant 0 : i32
    return %arg0, %c0_i32, %c0_i32_0 : i32, i32, i32
  }
}

</mosaic_0001>

<llo_original>
// kernel: tpu_custom_call.1
$region0: #{tpu_custom_call.1}
  #allocation0 [shape = 'u32[]', space=smem, size = 0x4, offset = 0x4, fixed_abs, tag = 'smem constant byte address 0x4 - core index']
  #allocation1 [shape = 'u32[144,128]{1,0:T(1,128)}', space=vmem, size = 0x12000, scoped, tag = 'internal scratch']
  %s0 = inlined_call_operand.hbm [shape: f32[16,128], index: 0, kind: input, shape index: {}]
  %s1 = inlined_call_operand.hbm [shape: f32[2,1,128], index: 1, kind: output, shape index: {}]
  %s2 = sld [smem:[#allocation0]]
  $region41: #{tpu_custom_call.1} parent=0
    _
  %s4 = ssub.s32 1, %s2
  %s5 = scalar_select 0, %s4, %s2
  $region1: #{tpu_custom_call.1} parent=0
    #allocation2 [shape = 'u8[8192]{0}', space=vmem, size = 0x2000, scoped, tag = 'input window, operand 0']
    #allocation3 [shape = 's32[2]{0}', space=sflag, size = 0x8, scoped, tag = 'scoped memory for tpu_custom_call.1']
    #allocation4 [shape = 's32[2]{0}', space=sflag, size = 0x8, scoped, tag = 'scoped memory for tpu_custom_call.1']
    #allocation5 [shape = 'u8[1024]{0}', space=vmem, size = 0x400, scoped, tag = 'output window, operand 0']
    %6 = vsyncpa [#allocation3], 0
    %s7 = scalar_lea.sflag [#allocation3], 1
    %8 = vsyncpa %s7, 0
    %9 = vsyncpa [#allocation4], 0
    %s10 = scalar_lea.sflag [#allocation4], 1
    %11 = vsyncpa %s10, 0
    loop: start=0, step=1, limit=4
    $region2: #{tpu_custom_call.1} parent=1 // loop_pre_header
      _
    $region3: #{tpu_custom_call.1} parent=1 // loop_header
      %s13 = sphi 0, %s17
      %p14 = scmp.ge.s32.totalorder %s13, 4
      %s23 = sphi 0, %s25
      %s26 = sphi 0, %s23
      %s27 = sphi 0, %s26
      %s43 = sphi 0, %s27
      %s49 = sphi 0, %s51
      %s52 = sphi 0, %s49
      %s53 = sphi 0, %s52
      %s69 = sphi 0, %s53
    $region4: #{tpu_custom_call.1} parent=1 // loop_header_branch
      %16 = sbr.rel (%p14) target = $region8
    $region5: #{tpu_custom_call.1} parent=1 // loop_body
      %s18 = ssub.s32 %s13, 1
      %s19 = ssub.s32 %s13, 2
      %s20 = sadd.s32 %s13, 1
      %s21 = ssub.s32 %s13, %s20
      %p22 = scmp.eq.s32.totalorder %s21, 0
      %s24 = sadd.s32 %s23, 1
      %s25 = scalar_select %p22, %s23, %s24
      %p28 = pneg %p22
      %p29 = scmp.eq.s32.totalorder %s13, 1
      %p30 = por %p28, %p29
      %p31 = scmp.ne.s32.totalorder %s23, %s26
      %p32 = scmp.eq.s32.totalorder %s13, 0
      %p33 = por %p31, %p32
      %p34 = scmp.ne.s32.totalorder %s23, %s26
      %p35 = scmp.eq.s32.totalorder %s18, 1
      %p36 = por %p34, %p35
      %p37 = scmp.ne.s32.totalorder %s26, %s27
      %p38 = scmp.eq.s32.totalorder %s18, 0
      %p39 = por %p37, %p38
      %p40 = scmp.ne.s32.totalorder %s26, %s27
      %p41 = scmp.eq.s32.totalorder %s19, 1
      %p42 = por %p40, %p41
      %p44 = scmp.ne.s32.totalorder %s27, %s43
      %p45 = scmp.eq.s32.totalorder %s19, 0
      %p46 = por %p44, %p45
      %s47 = ssub.s32 %s13, %s20
      %p48 = scmp.eq.s32.totalorder %s47, 0
      %s50 = sadd.s32 %s49, 1
      %s51 = scalar_select %p48, %s49, %s50
      %p54 = pneg %p48
      %p55 = scmp.eq.s32.totalorder %s13, 1
      %p56 = por %p54, %p55
      %p57 = scmp.ne.s32.totalorder %s49, %s52
      %p58 = scmp.eq.s32.totalorder %s13, 0
      %p59 = por %p57, %p58
      %p60 = scmp.ne.s32.totalorder %s49, %s52
      %p61 = scmp.eq.s32.totalorder %s18, 1
      %p62 = por %p60, %p61
      %p63 = scmp.ne.s32.totalorder %s52, %s53
      %p64 = scmp.eq.s32.totalorder %s18, 0
      %p65 = por %p63, %p64
      %p66 = scmp.ne.s32.totalorder %s52, %s53
      %p67 = scmp.eq.s32.totalorder %s19, 1
      %p68 = por %p66, %p67
      %p70 = scmp.ne.s32.totalorder %s53, %s69
      %p71 = scmp.eq.s32.totalorder %s19, 0
      %p72 = por %p70, %p71
      %p73 = scmp.le.s32.totalorder 1, %s13
      %p74 = scmp.lt.s32.totalorder %s13, 3
      %p75 = pnand %p73, %p74
      %p76 = pneg %p75
      // Predicated region
      $region9: #{tpu_custom_call.1} parent=5 // pred_check
        _
      $region10: #{tpu_custom_call.1} parent=5 // pred_check_branch
        %78 = sbr.rel (%p75) target = $region12
      $region11: #{tpu_custom_call.1} parent=5 // pred_region
        %s79 = ssub.s32 %s13, 1
      $region12: #{tpu_custom_call.1} parent=5 // pred_fallthru
        _
      %p80 = scmp.lt.s32.totalorder %s13, 2
      // Predicated region
      $region13: #{tpu_custom_call.1} parent=5 // pred_check
        %p81 = pneg %p80
      $region14: #{tpu_custom_call.1} parent=5 // pred_check_branch
        %83 = sbr.rel (%p81) target = $region16
      $region15: #{tpu_custom_call.1} parent=5 // pred_region
        // Predicated region
        $region17: #{tpu_custom_call.1} parent=15 // pred_check
          %p84 = pneg %p33
        $region18: #{tpu_custom_call.1} parent=15 // pred_check_branch
          %86 = sbr.rel (%p84) target = $region20
        $region19: #{tpu_custom_call.1} parent=15 // pred_region
          %s87 = sand.u32 %s23, 1
          %s88 = scalar_lea.sflag [#allocation3], %s87
          %s89 = sand.u32 %s23, 1
          %s90 = smul.addr %s89, 8
          %s91 = scalar_lea.vmem [#allocation2], %s90
          %s93 = ssub.s32 128, 128
          %94 = vsyncadd %s88, %s93
          %s95 = smul.addr %s13, 128
          %s96 = scalar_lea.hbm %s0, %s95
          %s98 = sshll.u32 %s91, 4
          %s99 = int_to_ptr.vmem [resolvable:$true] %s98
          %101 = dma.hbm_to_vmem [thread:$0]  %s96, 128, %s99, %s88
        $region20: #{tpu_custom_call.1} parent=15 // pred_fallthru
          _
      $region16: #{tpu_custom_call.1} parent=5 // pred_fallthru
        _
      %p102 = scmp.le.s32.totalorder 1, %s13
      %p103 = scmp.lt.s32.totalorder %s13, 3
      %p104 = pnand %p102, %p103
      %p105 = pneg %p104
      // Predicated region
      $region21: #{tpu_custom_call.1} parent=5 // pred_check
        _
      $region22: #{tpu_custom_call.1} parent=5 // pred_check_branch
        %107 = sbr.rel (%p104) target = $region24
      $region23: #{tpu_custom_call.1} parent=5 // pred_region
        %s108 = ssub.s32 %s13, 1
        %s109 = sand.u32 %s26, 1
        %s110 = scalar_lea.sflag [#allocation3], %s109
        %s111 = sand.u32 %s26, 1
        %s112 = smul.addr %s111, 8
        %s113 = scalar_lea.vmem [#allocation2], %s112
        // Predicated region
        $region25: #{tpu_custom_call.1} parent=23 // pred_check
          %p114 = pneg %p39
        $region26: #{tpu_custom_call.1} parent=23 // pred_check_branch
          %116 = sbr.rel (%p114) target = $region28
        $region27: #{tpu_custom_call.1} parent=23 // pred_region
          %117 = dma.done %s110, 128
        $region28: #{tpu_custom_call.1} parent=23 // pred_fallthru
          _
        %s118 = sand.u32 %s26, 1
        %s119 = scalar_lea.sflag [#allocation3], %s118
        %s120 = sand.u32 %s26, 1
        %s121 = smul.addr %s120, 8
        %s122 = scalar_lea.vmem [#allocation2], %s121
        %p123 = pneg %p39
        %p124 = pneg %p36
        %p125 = pneg %p65
        %p126 = pneg %p62
        %s127 = sand.u32 %s52, 1
        %s128 = scalar_lea.sflag [#allocation4], %s127
        %s129 = sand.u32 %s52, 1
        %s130 = scalar_lea.vmem [#allocation5], %s129
        %v131 = vld [vmem:[%s113] sm:$0xff]
        %v132 = vmax.f32 %v131, 0.0
        %v133 = vsub.f32 %v132, %v131
        %v134 = vand.u32 2147483647, %v131
        %v135 = vsub.f32 0.0, %v134
        %v136 = vmul.f32 %v135, 1.442695
        %v137 = vpow.pop %v136
        %v138 = vadd.f32 %v137, 1.0
        %v139 = vlog2.pop %v138
        %v140 = vmul.f32 %v139, 0.6931472
        %v141 = vmul.f32 -0.5, %v137
        %v142 = vadd.f32 %v141, 1.0
        %v143 = vmul.f32 %v142, %v137
        %v144 = vand.u32 2147483647, %v137
        %vm145 = vcmp.lt.f32.partialorder %v144, 0.0004427343
        %v146 = vsel %vm145, %v143, %v140
        %v147 = vadd.f32 %v133, %v146
        %v148 = vrot.slane %v147, 4
        %v149 = vadd.f32 %v147, %v148
        %v150 = vrot.slane %v149, 2
        %v151 = vadd.f32 %v149, %v150
        %v152 = vrot.slane %v151, 1
        %v153 = vadd.f32 %v151, %v152
        %154 = vst [vmem:[%s130] sm:$0x1] %v153
        %s155 = sand.u32 %s52, 1
        %s156 = scalar_lea.sflag [#allocation4], %s155
        %s157 = sand.u32 %s52, 1
        %s158 = scalar_lea.vmem [#allocation5], %s157
        // Predicated region
        $region29: #{tpu_custom_call.1} parent=23 // pred_check
          %p159 = pneg %p62
        $region30: #{tpu_custom_call.1} parent=23 // pred_check_branch
          %161 = sbr.rel (%p159) target = $region32
        $region31: #{tpu_custom_call.1} parent=23 // pred_region
          %s163 = ssub.s32 16, 16
          %164 = vsyncadd %s156, %s163
          %s165 = smul.addr %s18, 16
          %s166 = scalar_lea.hbm %s1, %s165
          %s168 = sshll.u32 %s158, 4
          %s169 = int_to_ptr.vmem [resolvable:$true] %s168
          %171 = dma.vmem_to_hbm [thread:$0]  %s169, 16, %s166, %s156
        $region32: #{tpu_custom_call.1} parent=23 // pred_fallthru
          _
      $region24: #{tpu_custom_call.1} parent=5 // pred_fallthru
        _
      %p172 = scmp.le.s32.totalorder 2, %s13
      // Predicated region
      $region33: #{tpu_custom_call.1} parent=5 // pred_check
        %p173 = pneg %p172
      $region34: #{tpu_custom_call.1} parent=5 // pred_check_branch
        %175 = sbr.rel (%p173) target = $region36
      $region35: #{tpu_custom_call.1} parent=5 // pred_region
        %s176 = ssub.s32 %s13, 2
        // Predicated region
        $region37: #{tpu_custom_call.1} parent=35 // pred_check
          %p177 = pneg %p68
        $region38: #{tpu_custom_call.1} parent=35 // pred_check_branch
          %179 = sbr.rel (%p177) target = $region40
        $region39: #{tpu_custom_call.1} parent=35 // pred_region
          %s180 = sand.u32 %s53, 1
          %s181 = scalar_lea.sflag [#allocation4], %s180
          %s182 = sand.u32 %s53, 1
          %s183 = scalar_lea.vmem [#allocation5], %s182
          %184 = dma.done %s181, 16
        $region40: #{tpu_custom_call.1} parent=35 // pred_fallthru
          _
      $region36: #{tpu_custom_call.1} parent=5 // pred_fallthru
        _
    $region6: #{tpu_custom_call.1} parent=1 // loop_footer
      %s17 = sadd.s32 1, %s13
    $region7: #{tpu_custom_call.1} parent=1 // loop_footer_branch
      %12 = sbr.rel target = $region3
    $region8: #{tpu_custom_call.1} parent=1 // loop_exit
      _
    %185 = vsyncpa [#allocation3], 1
    %s186 = scalar_lea.sflag [#allocation3], 1
    %187 = vsyncpa %s186, 1
    %188 = vsyncpa [#allocation4], 1
    %s189 = scalar_lea.sflag [#allocation4], 1
    %190 = vsyncpa %s189, 1

</llo_original>
